<compile_context>
chip_gen: v5e
topology: v5e:2x2
jax: 0.10.0
libtpu: 0.0.40
codegen_flags: <defaults>
</compile_context>

<pallas_src>
import functools

import jax
import jax.numpy as jnp
from jax.experimental import pallas as pl
from jax.experimental.pallas import tpu as pltpu

ALPHA = 0.2        # LeakyReLU negative slope
H1 = 128           # layer_1 width
H2 = 64            # layer_3 hidden width (true)
H2_PAD = 128       # layer_3 hidden width padded to a full lane tile
VMEM_TILE_BUDGET = 20 * 1024 * 1024   # double-buffered per-step tile budget


def _cdiv(a, b):
    return (a + b - 1) // b


def _round_up(x, m):
    return (x + m - 1) // m * m


def _leaky_relu(x, alpha):
    return jnp.where(x > 0, x, alpha * x)


def discriminator_kernel(x_ref, w1_ref, b1_ref, w3a_ref, b3a_ref,
                         w3b_ref, b3b_ref, out_ref, h1_ref):
    """One batch tile of the Discriminator forward pass (eval mode)."""
    x = x_ref[...]                                                     # (TB, NS)

    # layer_1: Linear(n_samples, 128) + LeakyReLU (+ Dropout = identity).
    h1 = jnp.dot(x, w1_ref[...], preferred_element_type=jnp.float32) + b1_ref[...]
    h1 = _leaky_relu(h1, ALPHA)                                        # (TB, 128)
    h1_ref[...] = h1.astype(h1_ref.dtype)

    # layer_3 part 1: Linear(128, 64), hidden zero-padded to 128 lanes.
    # Padded columns of W3a / b3a are zero -> padded h2 lanes stay exactly 0.
    h2 = jnp.dot(h1, w3a_ref[...], preferred_element_type=jnp.float32) + b3a_ref[...]
    h2 = _leaky_relu(h2, ALPHA)                                        # (TB, 128)

    # layer_3 part 2: Linear(64, 1) + Sigmoid.  An N=1 matmul wastes the MXU;
    # do broadcast-multiply + lane reduce on VPU/XLU.  w3b_ref is the
    # zero-padded (1, 128) weight row, so padded lanes contribute nothing.
    logit = jnp.sum(h2 * w3b_ref[...], axis=-1, keepdims=True) + b3b_ref[...]  # (TB, 1)
    # Exact sigmoid: kernel is HBM-bound, approx reciprocal buys nothing.
    out_ref[...] = (1.0 / (1.0 + jnp.exp(-logit))).astype(out_ref.dtype)


def _choose_batch_tile(batch, n_samples, tb_max):
    """Pick the batch tile: large enough to amortize the ~0.35 us/step pipeline
    overhead, small enough that the double-buffered tiles fit scoped VMEM on
    every generation (v7x is the tight one), and balanced so the last tile is
    not mostly padding. Also guarantees >= 2 grid steps for large batches so
    the "parallel" axis can shard across v7x's 2 TensorCores."""
    ns_vmem = _round_up(max(n_samples, 1), 128)
    # Per-row VMEM bytes of the double-buffered x / h1 / out tiles (the (tb,1)
    # logit block still occupies a full 128-lane vreg column in VMEM).
    bytes_per_row = 2 * 4 * (ns_vmem + H1 + 128)
    tb_cap = max(8, (VMEM_TILE_BUDGET // bytes_per_row) // 8 * 8)
    tb_max = max(8, min(tb_max, tb_cap))

    n_tiles = _cdiv(batch, tb_max)
    if n_tiles == 1 and batch >= 16:
        n_tiles = 2                       # feed both TensorCores on v7x
    return _round_up(_cdiv(batch, n_tiles), 8)


@functools.partial(jax.jit, static_argnames=("tb",))
def discriminator_forward(x, params, tb=2048):
    """Runs the Pallas kernel over batch tiles. Returns (out, h1) like the nn.Module."""
    w1, b1, w3a, b3a, w3b, b3b = params
    batch, n_samples = x.shape

    tb_eff = _choose_batch_tile(batch, n_samples, tb)
    grid = (pl.cdiv(batch, tb_eff),)

    # Only the tiny layer_3 weights are padded (64 -> 128 lanes). x and W1 are
    # consumed at their natural shapes (a block dim equal to the full array dim
    # is exempt from the 128-divisibility rule), so no HBM round trip over x.
    w3a_p = jnp.pad(w3a, ((0, 0), (0, H2_PAD - H2)))                   # (128, 128)
    b3a_p = jnp.pad(b3a, ((0, 0), (0, H2_PAD - H2)))                   # (1, 128)
    w3b_row = jnp.pad(w3b.T, ((0, 0), (0, H2_PAD - H2)))               # (1, 128)

    out, h1 = pl.pallas_call(
        discriminator_kernel,
        out_shape=(
            jax.ShapeDtypeStruct((batch, 1), jnp.float32),     # sigmoid prob
            jax.ShapeDtypeStruct((batch, H1), jnp.float32),    # layer_1 output
        ),
        grid=grid,
        in_specs=[
            pl.BlockSpec((tb_eff, n_samples), lambda i: (i, 0)),   # x batch tile
            pl.BlockSpec((n_samples, H1),     lambda i: (0, 0)),   # W1  (resident)
            pl.BlockSpec((1, H1),             lambda i: (0, 0)),   # b1
            pl.BlockSpec((H1, H2_PAD),        lambda i: (0, 0)),   # W3a (padded)
            pl.BlockSpec((1, H2_PAD),         lambda i: (0, 0)),   # b3a (padded)
            pl.BlockSpec((1, H2_PAD),         lambda i: (0, 0)),   # w3b row (padded)
            pl.BlockSpec((1, 1),              lambda i: (0, 0)),   # b3b
        ],
        out_specs=(
            pl.BlockSpec((tb_eff, 1),  lambda i: (i, 0)),
            pl.BlockSpec((tb_eff, H1), lambda i: (i, 0)),
        ),
        compiler_params=pltpu.CompilerParams(
            dimension_semantics=("parallel",),
            vmem_limit_bytes=32 * 1024 * 1024),
    )(x, w1, b1, w3a_p, b3a_p, w3b_row, b3b)

    return out, h1


def init_params(key, n_samples):
    """Deterministic parameter init matching the nn.Linear shapes.
    Weights are stored transposed: (in_features, out_features)."""
    k1, k2, k3, k4, k5, k6 = jax.random.split(key, 6)

    def uinit(k, shape, fan_in):
        bound = 1.0 / jnp.sqrt(fan_in)
        return jax.random.uniform(k, shape, jnp.float32, -bound, bound)

    w1 = uinit(k1, (n_samples, H1), n_samples)
    b1 = uinit(k2, (1, H1), n_samples)
    w3a = uinit(k3, (H1, H2), H1)
    b3a = uinit(k4, (1, H2), H1)
    w3b = uinit(k5, (H2, 1), H2)
    b3b = uinit(k6, (1, 1), H2)
    return (w1, b1, w3a, b3a, w3b, b3b)


def reference_forward(x, params):
    """Pure-JAX reference mirroring the PyTorch module in eval mode."""
    w1, b1, w3a, b3a, w3b, b3b = params
    h1 = _leaky_relu(x @ w1 + b1, ALPHA)
    h2 = _leaky_relu(h1 @ w3a + b3a, ALPHA)
    out = jax.nn.sigmoid(h2 @ w3b + b3b)
    return out, h1


if __name__ == "__main__":
    batch = 2
    n_samples = 8  # args.nsamples analog (sequence length of the sine samples)

    key = jax.random.PRNGKey(0)
    kx, kp = jax.random.split(key)
    x = jax.random.normal(kx, (batch, n_samples), jnp.float32)
    params = init_params(kp, n_samples)

    out, h1 = discriminator_forward(x, params)
    out, h1 = jax.block_until_ready((out, h1))

    ref_out, ref_h1 = reference_forward(x, params)

    assert out.shape == (batch, 1) and h1.shape == (batch, H1)
    assert jnp.allclose(h1, ref_h1, atol=1e-5, rtol=1e-5)
    assert jnp.allclose(out, ref_out, atol=1e-5, rtol=1e-5)

    print("KERNEL_OK")
</pallas_src>

<mosaic_0001>
module attributes {stable_mosaic.version = 11 : i64} {
  func.func @discriminator_kernel(%arg0: i32, %arg1: memref<8x8xf32, #tpu.memory_space<vmem>>, %arg2: memref<8x128xf32, #tpu.memory_space<vmem>>, %arg3: memref<1x128xf32, #tpu.memory_space<vmem>>, %arg4: memref<128x128xf32, #tpu.memory_space<vmem>>, %arg5: memref<1x128xf32, #tpu.memory_space<vmem>>, %arg6: memref<1x128xf32, #tpu.memory_space<vmem>>, %arg7: memref<1x1xf32, #tpu.memory_space<vmem>>, %arg8: memref<8x1xf32, #tpu.memory_space<vmem>>, %arg9: memref<8x128xf32, #tpu.memory_space<vmem>>) attributes {dimension_semantics = [#tpu.dimension_semantics<parallel>], iteration_bounds = array<i64: 1>, scalar_prefetch = 0 : i64, scratch_operands = 0 : i64, tpu.core_type = #tpu.core_type<tc>, window_params = [{transform_indices = @transform_0, window_bounds = array<i64: 8, 8>}, {pipeline_mode = #tpu.pipeline_mode<synchronous>, transform_indices = @transform_1, window_bounds = array<i64: 8, 128>}, {pipeline_mode = #tpu.pipeline_mode<synchronous>, transform_indices = @transform_2, window_bounds = array<i64: 1, 128>}, {pipeline_mode = #tpu.pipeline_mode<synchronous>, transform_indices = @transform_3, window_bounds = array<i64: 128, 128>}, {pipeline_mode = #tpu.pipeline_mode<synchronous>, transform_indices = @transform_4, window_bounds = array<i64: 1, 128>}, {pipeline_mode = #tpu.pipeline_mode<synchronous>, transform_indices = @transform_5, window_bounds = array<i64: 1, 128>}, {pipeline_mode = #tpu.pipeline_mode<synchronous>, transform_indices = @transform_6, window_bounds = array<i64: 1, 1>}, {transform_indices = @transform_7, window_bounds = array<i64: 8, 1>}, {transform_indices = @transform_8, window_bounds = array<i64: 8, 128>}]} {
    %c0 = arith.constant 0 : index
    %c0_0 = arith.constant 0 : index
    %0 = vector.load %arg1[%c0, %c0_0] : memref<8x8xf32, #tpu.memory_space<vmem>>, vector<8x8xf32>
    %c0_1 = arith.constant 0 : index
    %c0_2 = arith.constant 0 : index
    %1 = vector.load %arg2[%c0_1, %c0_2] : memref<8x128xf32, #tpu.memory_space<vmem>>, vector<8x128xf32>
    %cst = arith.constant dense<0.000000e+00> : vector<8x128xf32>
    %2 = tpu.matmul %0, %1, %cst {dimension_numbers = #tpu.dot_dimension_numbers<[1], [0], [0], [1], [0, 0, 1, 1], [], []>} : vector<8x8xf32>, vector<8x128xf32>, vector<8x128xf32> -> vector<8x128xf32>
    %c0_3 = arith.constant 0 : index
    %c0_4 = arith.constant 0 : index
    %3 = vector.load %arg3[%c0_3, %c0_4] : memref<1x128xf32, #tpu.memory_space<vmem>>, vector<1x128xf32>
    %4 = vector.broadcast %3 : vector<1x128xf32> to vector<8x128xf32>
    %5 = arith.addf %2, %4 : vector<8x128xf32>
    %cst_5 = arith.constant 0.000000e+00 : f32
    %6 = vector.broadcast %cst_5 : f32 to vector<8x128xf32>
    %7 = arith.cmpf ogt, %5, %6 : vector<8x128xf32>
    %cst_6 = arith.constant 2.000000e-01 : f32
    %8 = vector.broadcast %cst_6 : f32 to vector<8x128xf32>
    %9 = arith.mulf %8, %5 : vector<8x128xf32>
    %10 = arith.select %7, %5, %9 : vector<8x128xi1>, vector<8x128xf32>
    %c0_7 = arith.constant 0 : index
    %c0_8 = arith.constant 0 : index
    %11 = vector.load %arg9[%c0_7, %c0_8] : memref<8x128xf32, #tpu.memory_space<vmem>>, vector<8x128xf32>
    tpu.vector_store %arg9[%c0_7, %c0_8], %10 {strides = array<i32>} : memref<8x128xf32, #tpu.memory_space<vmem>>, vector<8x128xf32>,
    %c0_9 = arith.constant 0 : index
    %c0_10 = arith.constant 0 : index
    %12 = vector.load %arg4[%c0_9, %c0_10] : memref<128x128xf32, #tpu.memory_space<vmem>>, vector<128x128xf32>
    %cst_11 = arith.constant dense<0.000000e+00> : vector<8x128xf32>
    %13 = tpu.matmul %10, %12, %cst_11 {dimension_numbers = #tpu.dot_dimension_numbers<[1], [0], [0], [1], [0, 0, 1, 1], [], []>} : vector<8x128xf32>, vector<128x128xf32>, vector<8x128xf32> -> vector<8x128xf32>
    %c0_12 = arith.constant 0 : index
    %c0_13 = arith.constant 0 : index
    %14 = vector.load %arg5[%c0_12, %c0_13] : memref<1x128xf32, #tpu.memory_space<vmem>>, vector<1x128xf32>
    %15 = vector.broadcast %14 : vector<1x128xf32> to vector<8x128xf32>
    %16 = arith.addf %13, %15 : vector<8x128xf32>
    %cst_14 = arith.constant 0.000000e+00 : f32
    %17 = vector.broadcast %cst_14 : f32 to vector<8x128xf32>
    %18 = arith.cmpf ogt, %16, %17 : vector<8x128xf32>
    %cst_15 = arith.constant 2.000000e-01 : f32
    %19 = vector.broadcast %cst_15 : f32 to vector<8x128xf32>
    %20 = arith.mulf %19, %16 : vector<8x128xf32>
    %21 = arith.select %18, %16, %20 : vector<8x128xi1>, vector<8x128xf32>
    %c0_16 = arith.constant 0 : index
    %c0_17 = arith.constant 0 : index
    %22 = vector.load %arg6[%c0_16, %c0_17] : memref<1x128xf32, #tpu.memory_space<vmem>>, vector<1x128xf32>
    %23 = vector.broadcast %22 : vector<1x128xf32> to vector<8x128xf32>
    %24 = arith.mulf %21, %23 : vector<8x128xf32>
    %cst_18 = arith.constant dense<0.000000e+00> : vector<8xf32>
    %25 = vector.multi_reduction <add>, %24, %cst_18 [1] : vector<8x128xf32> to vector<8xf32>
    %26 = vector.shape_cast %25 : vector<8xf32> to vector<8x1xf32>
    %c0_19 = arith.constant 0 : index
    %c0_20 = arith.constant 0 : index
    %27 = vector.load %arg7[%c0_19, %c0_20] : memref<1x1xf32, #tpu.memory_space<vmem>>, vector<1x1xf32>
    %28 = vector.broadcast %27 : vector<1x1xf32> to vector<8x1xf32>
    %29 = arith.addf %26, %28 : vector<8x1xf32>
    %cst_21 = arith.constant 0.000000e+00 : f32
    %30 = vector.broadcast %cst_21 : f32 to vector<8x1xf32>
    %31 = arith.subf %30, %29 : vector<8x1xf32>
    %32 = math.exp %31 : vector<8x1xf32>
    %cst_22 = arith.constant 1.000000e+00 : f32
    %33 = vector.broadcast %cst_22 : f32 to vector<8x1xf32>
    %34 = arith.addf %33, %32 : vector<8x1xf32>
    %cst_23 = arith.constant 1.000000e+00 : f32
    %35 = vector.broadcast %cst_23 : f32 to vector<8x1xf32>
    %36 = arith.divf %35, %34 : vector<8x1xf32>
    %c0_24 = arith.constant 0 : index
    %c0_25 = arith.constant 0 : index
    %37 = vector.load %arg8[%c0_24, %c0_25] : memref<8x1xf32, #tpu.memory_space<vmem>>, vector<8x1xf32>
    tpu.vector_store %arg8[%c0_24, %c0_25], %36 {strides = array<i32>} : memref<8x1xf32, #tpu.memory_space<vmem>>, vector<8x1xf32>,
    return
  }
  func.func @transform_0(%arg0: i32) -> (i32, i32) {
    %c0_i32 = arith.constant 0 : i32
    %c0_i32_0 = arith.constant 0 : i32
    return %arg0, %c0_i32 : i32, i32
  }
  func.func @transform_1(%arg0: i32) -> (i32, i32) {
    %c0_i32 = arith.constant 0 : i32
    %c0_i32_0 = arith.constant 0 : i32
    %c0_i32_1 = arith.constant 0 : i32
    return %c0_i32, %c0_i32_0 : i32, i32
  }
  func.func @transform_2(%arg0: i32) -> (i32, i32) {
    %c0_i32 = arith.constant 0 : i32
    %c0_i32_0 = arith.constant 0 : i32
    %c0_i32_1 = arith.constant 0 : i32
    return %c0_i32, %c0_i32_0 : i32, i32
  }
  func.func @transform_3(%arg0: i32) -> (i32, i32) {
    %c0_i32 = arith.constant 0 : i32
    %c0_i32_0 = arith.constant 0 : i32
    %c0_i32_1 = arith.constant 0 : i32
    return %c0_i32, %c0_i32_0 : i32, i32
  }
  func.func @transform_4(%arg0: i32) -> (i32, i32) {
    %c0_i32 = arith.constant 0 : i32
    %c0_i32_0 = arith.constant 0 : i32
    %c0_i32_1 = arith.constant 0 : i32
    return %c0_i32, %c0_i32_0 : i32, i32
  }
  func.func @transform_5(%arg0: i32) -> (i32, i32) {
    %c0_i32 = arith.constant 0 : i32
    %c0_i32_0 = arith.constant 0 : i32
    %c0_i32_1 = arith.constant 0 : i32
    return %c0_i32, %c0_i32_0 : i32, i32
  }
  func.func @transform_6(%arg0: i32) -> (i32, i32) {
    %c0_i32 = arith.constant 0 : i32
    %c0_i32_0 = arith.constant 0 : i32
    %c0_i32_1 = arith.constant 0 : i32
    return %c0_i32, %c0_i32_0 : i32, i32
  }
  func.func @transform_7(%arg0: i32) -> (i32, i32) {
    %c0_i32 = arith.constant 0 : i32
    %c0_i32_0 = arith.constant 0 : i32
    return %arg0, %c0_i32 : i32, i32
  }
  func.func @transform_8(%arg0: i32) -> (i32, i32) {
    %c0_i32 = arith.constant 0 : i32
    %c0_i32_0 = arith.constant 0 : i32
    return %arg0, %c0_i32 : i32, i32
  }
}

</mosaic_0001>

<llo_original>
// kernel: discriminator_forward.1
$region0: #{discriminator_forward.1}
  #allocation0 [shape = 'u32[]', space=smem, size = 0x4, offset = 0x4, fixed_abs, tag = 'smem constant byte address 0x4 - core index']
  #allocation1 [shape = 'u32[72,128]{1,0:T(1,128)}', space=vmem, size = 0x9000, scoped, tag = 'internal scratch']
  #allocation2 [shape = 'f32[1,1]{1,0:T(1,128)S(1)}', space=vmem, size = 0x200, scoped, tag = 'scoped memory for discriminator_forward.1']
  %s0 = inlined_call_operand.vmem [shape: f32[2,8], index: 0, kind: input, shape index: {}]
  %s1 = inlined_call_operand.vmem [shape: f32[8,128], index: 1, kind: input, shape index: {}]
  %s2 = inlined_call_operand.vmem [shape: f32[1,128], index: 2, kind: input, shape index: {}]
  %s3 = inlined_call_operand.vmem [shape: f32[128,128], index: 3, kind: input, shape index: {}]
  %s4 = inlined_call_operand.vmem [shape: f32[1,128], index: 4, kind: input, shape index: {}]
  %s5 = inlined_call_operand.vmem [shape: f32[1,128], index: 5, kind: input, shape index: {}]
  %s6 = inlined_call_operand.<no memory space> [shape: f32[1,1], index: 6, kind: input, shape index: {}]
  %s7 = inlined_call_operand.vmem [shape: f32[2,1], index: 7, kind: output, shape index: {0}]
  %s8 = inlined_call_operand.hbm [shape: f32[2,128], index: 8, kind: output, shape index: {1}]
  %9 = xla_tuple %s7, %s8
  %s10 = sld [smem:[#allocation0]]
  $region76: #{discriminator_forward.1} parent=0
    _
  %s12 = ssub.s32 1, %s10
  %s13 = scalar_select 0, %s12, %s10
  %v14 = vstv %s6
  %15 = vst [vmem:[#allocation2] sm:$0x1] %v14
  $region1: #{discriminator_forward.1} parent=0
    #allocation3 [shape = 'u8[4096]{0}', space=vmem, size = 0x1000, scoped, tag = 'output window, operand 0, single buffered']
    #allocation4 [shape = 'u8[4096]{0}', space=vmem, size = 0x1000, scoped, tag = 'output window, operand 1, single buffered']
    #allocation5 [shape = 's32[1]{0}', space=sflag, size = 0x4, scoped, tag = 'scoped memory for discriminator_forward.1']
    %16 = vsyncpa [#allocation5], 0
    // Predicated region
    $region2: #{discriminator_forward.1} parent=1 // pred_check
      _
    $region3: #{discriminator_forward.1} parent=1 // pred_check_branch
      %18 = sbr.rel (0) target = $region5
    $region4: #{discriminator_forward.1} parent=1 // pred_region
      _
    $region5: #{discriminator_forward.1} parent=1 // pred_fallthru
      _
    // Predicated region
    $region6: #{discriminator_forward.1} parent=1 // pred_check
      _
    $region7: #{discriminator_forward.1} parent=1 // pred_check_branch
      %20 = sbr.rel (0) target = $region9
    $region8: #{discriminator_forward.1} parent=1 // pred_region
      _
    $region9: #{discriminator_forward.1} parent=1 // pred_fallthru
      _
    // Predicated region
    $region10: #{discriminator_forward.1} parent=1 // pred_check
      _
    $region11: #{discriminator_forward.1} parent=1 // pred_check_branch
      %22 = sbr.rel (0) target = $region13
    $region12: #{discriminator_forward.1} parent=1 // pred_region
      _
    $region13: #{discriminator_forward.1} parent=1 // pred_fallthru
      _
    // Predicated region
    $region14: #{discriminator_forward.1} parent=1 // pred_check
      _
    $region15: #{discriminator_forward.1} parent=1 // pred_check_branch
      %24 = sbr.rel (0) target = $region17
    $region16: #{discriminator_forward.1} parent=1 // pred_region
      _
    $region17: #{discriminator_forward.1} parent=1 // pred_fallthru
      _
    // Predicated region
    $region18: #{discriminator_forward.1} parent=1 // pred_check
      _
    $region19: #{discriminator_forward.1} parent=1 // pred_check_branch
      %26 = sbr.rel (0) target = $region21
    $region20: #{discriminator_forward.1} parent=1 // pred_region
      _
    $region21: #{discriminator_forward.1} parent=1 // pred_fallthru
      _
    // Predicated region
    $region22: #{discriminator_forward.1} parent=1 // pred_check
      _
    $region23: #{discriminator_forward.1} parent=1 // pred_check_branch
      %28 = sbr.rel (0) target = $region25
    $region24: #{discriminator_forward.1} parent=1 // pred_region
      _
    $region25: #{discriminator_forward.1} parent=1 // pred_fallthru
      _
    // Predicated region
    $region26: #{discriminator_forward.1} parent=1 // pred_check
      _
    $region27: #{discriminator_forward.1} parent=1 // pred_check_branch
      %30 = sbr.rel (0) target = $region29
    $region28: #{discriminator_forward.1} parent=1 // pred_region
      _
    $region29: #{discriminator_forward.1} parent=1 // pred_fallthru
      _
    %v31 = vld [vmem:[%s0] sm:$0xff]
    %v32 = vld [vmem:[%s1] sm:$0xff]
    %v33 = vld [vmem:[%s2] sm:$0x1]
    %v35 = vperm.slane %v33, 0
    %vm37 = vcmask 64512
    %v39 = vsel %vm37, %v31, 0
    %41 = vmatpush.msra.mxu0 0.0
    %42 = vmatpush.msra.mxu0 0.0
    %43 = vmatpush.msra.mxu0 0.0
    %44 = vmatpush.msra.mxu0 0.0
    %45 = vmatpush.msra.mxu0 0.0
    %46 = vmatpush.msra.mxu0 0.0
    %47 = vmatpush.msra.mxu0 0.0
    %48 = vmatpush.msra.mxu0 0.0
    %49 = vmatpush.msra.mxu0 0.0
    %50 = vmatpush.msra.mxu0 0.0
    %51 = vmatpush.msra.mxu0 0.0
    %52 = vmatpush.msra.mxu0 0.0
    %53 = vmatpush.msra.mxu0 0.0
    %54 = vmatpush.msra.mxu0 0.0
    %55 = vmatpush.msra.mxu0 0.0
    %56 = vmatpush.msra.mxu0 %v32
    %57 = vmatmul.f32.gmra.mxu0 %v39
    %v58 = vpop.f32.mrf.mxu0
    %v59 = vadd.f32 %v35, %v58
    %60 = vdwg.mxu0
    %vm61 = vcmp.gt.f32.partialorder %v59, 0.0
    %v62 = vmul.f32 %v59, 0.2
    %v63 = vsel %vm61, %v59, %v62
    %64 = vst [vmem:[#allocation4] sm:$0xff] %v63
    %v65 = vld [vmem:[%s3] sm:$0xff]
    %v66 = vld [vmem:[%s3 + $0x8] sm:$0xff]
    %v67 = vld [vmem:[%s3 + $0x10] sm:$0xff]
    %v68 = vld [vmem:[%s3 + $0x18] sm:$0xff]
    %v69 = vld [vmem:[%s3 + $0x20] sm:$0xff]
    %v70 = vld [vmem:[%s3 + $0x28] sm:$0xff]
    %v71 = vld [vmem:[%s3 + $0x30] sm:$0xff]
    %v72 = vld [vmem:[%s3 + $0x38] sm:$0xff]
    %v73 = vld [vmem:[%s3 + $0x40] sm:$0xff]
    %v74 = vld [vmem:[%s3 + $0x48] sm:$0xff]
    %v75 = vld [vmem:[%s3 + $0x50] sm:$0xff]
    %v76 = vld [vmem:[%s3 + $0x58] sm:$0xff]
    %v77 = vld [vmem:[%s3 + $0x60] sm:$0xff]
    %v78 = vld [vmem:[%s3 + $0x68] sm:$0xff]
    %v79 = vld [vmem:[%s3 + $0x70] sm:$0xff]
    %v80 = vld [vmem:[%s3 + $0x78] sm:$0xff]
    %v81 = vld [vmem:[%s4] sm:$0x1]
    %v83 = vperm.slane %v81, 0
    %85 = vmatpush.msra.mxu0 %v80
    %86 = vmatpush.msra.mxu0 %v79
    %87 = vmatpush.msra.mxu0 %v78
    %88 = vmatpush.msra.mxu0 %v77
    %89 = vmatpush.msra.mxu0 %v76
    %90 = vmatpush.msra.mxu0 %v75
    %91 = vmatpush.msra.mxu0 %v74
    %92 = vmatpush.msra.mxu0 %v73
    %93 = vmatpush.msra.mxu0 %v72
    %94 = vmatpush.msra.mxu0 %v71
    %95 = vmatpush.msra.mxu0 %v70
    %96 = vmatpush.msra.mxu0 %v69
    %97 = vmatpush.msra.mxu0 %v68
    %98 = vmatpush.msra.mxu0 %v67
    %99 = vmatpush.msra.mxu0 %v66
    %100 = vmatpush.msra.mxu0 %v65
    %101 = vmatmul.f32.gmra.mxu0 %v63
    %v102 = vpop.f32.mrf.mxu0
    %v103 = vadd.f32 %v83, %v102
    %104 = vdwg.mxu0
    %vm105 = vcmp.gt.f32.partialorder %v103, 0.0
    %v106 = vmul.f32 %v103, 0.2
    %v107 = vsel %vm105, %v103, %v106
    %v108 = vld [vmem:[%s5] sm:$0x1]
    %v110 = vperm.slane %v108, 0
    %v112 = vmul.f32 %v107, %v110
    %113 = vadd.xlane.f32.xlu0 %v112
    %v114 = vpop.xlane.xlu0 %113
    %v115 = vld [vmem:[#allocation2] sm:$0x1]
    %v117 = vperm.slane %v115, 0
    %v119 = vadd.f32 %v114, %v117
    %v120 = vsub.f32 0.0, %v119
    %v121 = vmul.f32 %v120, 1.442695
    %v122 = vpow.pop %v121
    %v123 = vadd.f32 %v122, 1.0
    %v124 = vrcp.pop %v123
    %v125 = vmul.f32 %v123, %v124
    %v126 = vsub.f32 1.0, %v125
    %v127 = vmul.f32 %v124, %v126
    %v128 = vadd.f32 %v124, %v127
    %vm129 = vweird.f32 %v123
    %vm130 = vweird.f32 %v124
    %vm131 = vmor %vm129, %vm130
    %v132 = vsel %vm131, %v124, %v128
    %v133 = vand.u32 2147483647, %v123
    %vm134 = vcmp.eq.f32.partialorder %v133, 8.507059e+37
    %v135 = vand.u32 %v123, 2147483648
    %v136 = vor.u32 1.1754944e-38, %v135
    %v137 = vsel %vm134, %v136, %v132
    %v138 = vmul.f32 1.0, %v137
    %vm139 = vcmask 7168
    %140 = vst.msk [vmem:[#allocation3] sm:$0xff] %vm139, %v138
    // Predicated region
    $region30: #{discriminator_forward.1} parent=1 // pred_check
      _
    $region31: #{discriminator_forward.1} parent=1 // pred_check_branch
      %142 = sbr.rel (0) target = $region33
    $region32: #{discriminator_forward.1} parent=1 // pred_region
      // Predicated region
      $region34: #{discriminator_forward.1} parent=32 // pred_check
        _
      $region35: #{discriminator_forward.1} parent=32 // pred_check_branch
        %144 = sbr.rel (0) target = $region37
      $region36: #{discriminator_forward.1} parent=32 // pred_region
        // Predicated region
        $region38: #{discriminator_forward.1} parent=36 // pred_check
          _
        $region39: #{discriminator_forward.1} parent=36 // pred_check_branch
          %146 = sbr.rel target = $region41
        $region40: #{discriminator_forward.1} parent=36 // pred_region
          // Predicated region
          $region53: #{discriminator_forward.1} parent=40 // pred_check
            _
          $region54: #{discriminator_forward.1} parent=40 // pred_check_branch
            %162 = sbr.rel (0) target = $region56
          $region55: #{discriminator_forward.1} parent=40 // pred_region
            %s164 = ssub.s32 4, 1
            loop: start=0, step=1, limit=1
            $region57: #{discriminator_forward.1} parent=55 // loop_pre_header
              _
            $region58: #{discriminator_forward.1} parent=55 // loop_header
              %s166 = sphi 0, %s170
              %p167 = scmp.ge.s32.totalorder %s166, 1
              %s171 = sphi [#allocation3], [#allocation3]
              %s172 = sphi %s7, %s7
            $region59: #{discriminator_forward.1} parent=55 // loop_header_branch
              %169 = sbr.rel (%p167) target = $region63
            $region60: #{discriminator_forward.1} parent=55 // loop_body
              %v173 = vld [vmem:[%s171] sm:%s164]
              %174 = vst [vmem:[%s172] sm:%s164] %v173
            $region61: #{discriminator_forward.1} parent=55 // loop_footer
              %s170 = sadd.s32 1, %s166
            $region62: #{discriminator_forward.1} parent=55 // loop_footer_branch
              %165 = sbr.rel target = $region58
            $region63: #{discriminator_forward.1} parent=55 // loop_exit
              _
          $region56: #{discriminator_forward.1} parent=40 // pred_fallthru
            _
        $region41: #{discriminator_forward.1} parent=36 // pred_fallthru
          _
        // Predicated region
        $region42: #{discriminator_forward.1} parent=36 // pred_check
          _
        $region43: #{discriminator_forward.1} parent=36 // pred_check_branch
          %148 = sbr.rel (0) target = $region45
        $region44: #{discriminator_forward.1} parent=36 // pred_region
          %s150 = ssub.s32 4, 1
          loop: start=0, step=1, limit=1
          $region46: #{discriminator_forward.1} parent=44 // loop_pre_header
            _
          $region47: #{discriminator_forward.1} parent=44 // loop_header
            %s152 = sphi 0, %s156
            %p153 = scmp.ge.s32.totalorder %s152, 1
            %s157 = sphi [#allocation3], [#allocation3]
            %s158 = sphi %s7, %s7
          $region48: #{discriminator_forward.1} parent=44 // loop_header_branch
            %155 = sbr.rel (%p153) target = $region52
          $region49: #{discriminator_forward.1} parent=44 // loop_body
            %v159 = vld [vmem:[%s157] sm:%s150]
            %160 = vst [vmem:[%s158] sm:%s150] %v159
          $region50: #{discriminator_forward.1} parent=44 // loop_footer
            %s156 = sadd.s32 1, %s152
          $region51: #{discriminator_forward.1} parent=44 // loop_footer_branch
            %151 = sbr.rel target = $region47
          $region52: #{discriminator_forward.1} parent=44 // loop_exit
            _
        $region45: #{discriminator_forward.1} parent=36 // pred_fallthru
          _
      $region37: #{discriminator_forward.1} parent=32 // pred_fallthru
        _
      %175 = vnop
    $region33: #{discriminator_forward.1} parent=1 // pred_fallthru
      _
    // Predicated region
    $region64: #{discriminator_forward.1} parent=1 // pred_check
      _
    $region65: #{discriminator_forward.1} parent=1 // pred_check_branch
      %177 = sbr.rel (0) target = $region67
    $region66: #{discriminator_forward.1} parent=1 // pred_region
      %179 = vsyncadd [#allocation5], 96
      %s180 = sshll.u32 [#allocation4], 4
      %s181 = int_to_ptr.vmem [resolvable:$true] %s180
      %s182 = sshll.u32 %s8, 4
      %s183 = int_to_ptr.hbm [resolvable:$true] %s182
      %188 = dma.vmem_to_hbm [thread:$0]  %s181, 32, %s183, [#allocation5], 32, 32, 2
    $region67: #{discriminator_forward.1} parent=1 // pred_fallthru
      _
    // Predicated region
    $region68: #{discriminator_forward.1} parent=1 // pred_check
      _
    $region69: #{discriminator_forward.1} parent=1 // pred_check_branch
      %190 = sbr.rel (0) target = $region71
    $region70: #{discriminator_forward.1} parent=1 // pred_region
      _
    $region71: #{discriminator_forward.1} parent=1 // pred_fallthru
      _
    // Predicated region
    $region72: #{discriminator_forward.1} parent=1 // pred_check
      _
    $region73: #{discriminator_forward.1} parent=1 // pred_check_branch
      %192 = sbr.rel (0) target = $region75
    $region74: #{discriminator_forward.1} parent=1 // pred_region
      %194 = dma.done [#allocation5], 128
    $region75: #{discriminator_forward.1} parent=1 // pred_fallthru
      _
    %195 = vsyncpa [#allocation5], 1

</llo_original>
